<compile_context>
chip_gen: v7x
topology: tpu7x:2x2x1
jax: 0.10.0
libtpu: 0.0.40
codegen_flags: <defaults>
</compile_context>

<pallas_src>
import jax
import jax.numpy as jnp
from jax.experimental import pallas as pl
from jax.experimental.pallas import tpu as pltpu


# ----------------------------------------------------------------------------
# Glue: BoxRelationalEmbedding (elementwise sinusoidal feature prep, plain JAX)
# TODO(synk): this elementwise feature prep could be fused into the geometry
#             kernel to avoid materializing the (bs, n, n, 64) embedding in HBM.
# ----------------------------------------------------------------------------
def box_relational_embedding(boxes, dim_g=64, wave_len=1000.0):
    # boxes: (bs, n, 4) = (x_min, y_min, x_max, y_max)
    bs, n, _ = boxes.shape
    x_min, y_min, x_max, y_max = jnp.split(boxes, 4, axis=-1)  # (bs, n, 1) each
    cx = (x_min + x_max) * 0.5
    cy = (y_min + y_max) * 0.5
    w = (x_max - x_min) + 1.0
    h = (y_max - y_min) + 1.0

    delta_x = cx - jnp.reshape(cx, (bs, 1, n))
    delta_x = jnp.log(jnp.clip(jnp.abs(delta_x / w), 1e-3, None))
    delta_y = cy - jnp.reshape(cy, (bs, 1, n))
    delta_y = jnp.log(jnp.clip(jnp.abs(delta_y / h), 1e-3, None))
    delta_w = jnp.log(w / jnp.reshape(w, (bs, 1, n)))
    delta_h = jnp.log(h / jnp.reshape(h, (bs, 1, n)))

    position_mat = jnp.stack([delta_x, delta_y, delta_w, delta_h], axis=-1)  # (bs,n,n,4)

    n_freq = dim_g // 8
    feat_range = jnp.arange(n_freq, dtype=jnp.float32)
    dim_mat = 1.0 / (wave_len ** (feat_range / float(n_freq)))               # (8,)
    mul_mat = (position_mat[..., None] * 100.0) * dim_mat                    # (bs,n,n,4,8)
    mul_mat = mul_mat.reshape(bs, n, n, 4 * n_freq)                          # (bs,n,n,32)
    emb = jnp.concatenate([jnp.sin(mul_mat), jnp.cos(mul_mat)], axis=-1)     # (bs,n,n,64)
    return emb.astype(jnp.float32)


# ----------------------------------------------------------------------------
# Pallas kernel 1: geometry bias, hoisted out of the layer stack.
#   out[b, h, q, k] = log(clamp(relu(sum_c emb[b,q,k,c] * Wg[h,c] + bg[h]), 1e-6))
#                     + (-1e30 if key k of batch b is padded else 0)
# Layer-invariant, lane-dense (n on lanes), no XLA transpose afterwards.
# ----------------------------------------------------------------------------
def make_geom_kernel(h):
    def kernel(emb_ref, mask_ref, w_ref, b_ref, out_ref):
        e = emb_ref[0]                                         # (n, n, 64)
        neg = jnp.where(mask_ref[0] > 0.5, -1e30, 0.0)         # (1, n) additive mask
        for hh in range(h):
            wg = jnp.sum(e * w_ref[hh], axis=-1) + b_ref[hh]   # (n, n)
            wg = jnp.maximum(wg, 0.0)                          # ReLU
            out_ref[0, hh] = jnp.log(jnp.maximum(wg, 1e-6)) + neg
    return kernel


def geometry_bias(emb, mask_f, wg_w, wg_b):
    bs, n, _, dg = emb.shape
    h = wg_w.shape[0]
    return pl.pallas_call(
        make_geom_kernel(h),
        out_shape=jax.ShapeDtypeStruct((bs, h, n, n), jnp.float32),
        grid=(bs,),
        in_specs=[
            pl.BlockSpec((1, n, n, dg), lambda b: (b, 0, 0, 0)),   # emb
            pl.BlockSpec((1, 1, n), lambda b: (b, 0, 0)),          # padding mask
            pl.BlockSpec((h, dg), lambda b: (0, 0)),               # Wg (per-head rows)
            pl.BlockSpec((h, 1, 1), lambda b: (0, 0, 0)),          # Wg bias
        ],
        out_specs=pl.BlockSpec((1, h, n, n), lambda b: (b, 0, 0, 0)),
        compiler_params=pltpu.CompilerParams(
            dimension_semantics=("parallel",),
            vmem_limit_bytes=32 * 1024 * 1024),
    )(emb, mask_f, wg_w, wg_b)


# ----------------------------------------------------------------------------
# Pallas kernel 2: fused N-layer encoder stack.
# grid = (batch_blocks, n_layers); activation stays resident in the output
# VMEM block across the layer axis; per-layer weights streamed via the layer
# grid axis (stacked (N, ...) arrays, default double-buffering).
# ----------------------------------------------------------------------------
def _layer_norm(v, g, b, eps=1e-5):
    mu = jnp.mean(v, axis=-1, keepdims=True)
    var = jnp.mean((v - mu) ** 2, axis=-1, keepdims=True)
    return (v - mu) * jax.lax.rsqrt(var + eps) * g + b


# vecs rows: 0 b_o, 1 g_mh, 2 b_mh, 3 g_ln, 4 b_ln, 5 g_ff, 6 b_ff, 7 b2
def make_fused_encoder_kernel(h, d_kv, bb, n, dm, dff):
    scale = 1.0 / (float(d_kv) ** 0.5)
    M = bb * n

    def kernel(x_ref, pos_ref, bias_ref,
               w_qkv_ref, w_o_ref, b_qkv_ref, vec_ref,
               w1_ref, b1_ref, w2_ref, out_ref):
        l = pl.program_id(1)

        # Layer 0: seed the resident activation block from the input.
        @pl.when(l == 0)
        def _():
            out_ref[...] = x_ref[...]

        x3 = out_ref[...]                              # (bb, n, dm) current activation
        x2 = x3.reshape(M, dm)                         # flatten batch*seq for the MXU
        q2 = (x3 + pos_ref[...]).reshape(M, dm)

        x_bf = x2.astype(jnp.bfloat16)
        q_bf = q2.astype(jnp.bfloat16)

        w_qkv = w_qkv_ref[0]                           # (3, h, dm, d_kv)  bf16
        w_o = w_o_ref[0]                               # (h, d_kv, dm)     bf16
        b_qkv = b_qkv_ref[0]                           # (3, h, d_kv)      f32
        vecs = vec_ref[0]                              # (8, dm)           f32
        b_o, g_mh, b_mh, g_ln, b_ln, g_ff, b_ff, b2 = [vecs[i:i + 1] for i in range(8)]

        bias = bias_ref[...]                           # (bb, h, n, n)  log-geom + mask

        # ---- multi-head box attention: per-head accumulation, no concat ----
        mh = jnp.zeros((M, dm), jnp.float32)
        for hh in range(h):
            qh = jnp.dot(q_bf, w_qkv[0, hh],
                         preferred_element_type=jnp.float32) + b_qkv[0, hh]   # (M, d_kv)
            kh = jnp.dot(q_bf, w_qkv[1, hh],
                         preferred_element_type=jnp.float32) + b_qkv[1, hh]
            vh = jnp.dot(x_bf, w_qkv[2, hh],
                         preferred_element_type=jnp.float32) + b_qkv[2, hh]

            qh3 = qh.reshape(bb, n, d_kv).astype(jnp.bfloat16)
            kh3 = kh.reshape(bb, n, d_kv).astype(jnp.bfloat16)
            vh3 = vh.reshape(bb, n, d_kv).astype(jnp.bfloat16)

            logits = jnp.einsum("bqd,bkd->bqk", qh3, kh3,
                                preferred_element_type=jnp.float32) * scale   # (bb,n,n)
            logits = logits + bias[:, hh]
            m = jnp.max(logits, axis=-1, keepdims=True)
            e = jnp.exp(logits - m)
            p = e * pl.reciprocal(jnp.sum(e, axis=-1, keepdims=True), approx=True)

            oh = jnp.einsum("bqk,bkv->bqv", p.astype(jnp.bfloat16), vh3,
                            preferred_element_type=jnp.float32)               # (bb,n,d_kv)
            mh = mh + jnp.dot(oh.reshape(M, d_kv).astype(jnp.bfloat16), w_o[hh],
                              preferred_element_type=jnp.float32)             # (M, dm)
        mh = mh + b_o

        # ---- residual + layer norms + feed-forward (all f32 elementwise) ----
        a1 = _layer_norm(q2 + mh, g_mh, b_mh)          # MHBoxAttention internal LN
        a2 = _layer_norm(x2 + a1, g_ln, b_ln)          # EncoderLayerWithBox.lnorm

        h1 = jnp.dot(a2.astype(jnp.bfloat16), w1_ref[0],
                     preferred_element_type=jnp.float32) + b1_ref[0]
        h1 = jnp.maximum(h1, 0.0)
        ff = jnp.dot(h1.astype(jnp.bfloat16), w2_ref[0],
                     preferred_element_type=jnp.float32) + b2
        a3 = _layer_norm(a2 + ff, g_ff, b_ff)          # PositionWiseFeedForward LN

        # outer residual of MutliLevelEncoderWithBox
        out_ref[...] = (a3 + x2).reshape(bb, n, dm)

    return kernel


def _encoder_cost(bs, n, dm, h, d_kv, dff, n_layers):
    M = bs * n
    per_layer = (2 * M * dm * 3 * h * d_kv        # q/k/v projections
                 + 4 * bs * h * n * n * d_kv      # scores + att @ V
                 + 2 * M * h * d_kv * dm          # per-head out-proj accumulation
                 + 4 * M * dm * dff)              # FFN
    flops = n_layers * per_layer
    transcendentals = n_layers * bs * h * n * n   # softmax exp
    bytes_accessed = 4 * (3 * bs * n * dm + bs * h * n * n)
    bytes_accessed += n_layers * (2 * (3 * h * dm * d_kv + h * d_kv * dm + 2 * dm * dff)
                                  + 4 * (3 * h * d_kv + 8 * dm + dff))
    return pl.CostEstimate(flops=int(flops), transcendentals=int(transcendentals),
                           bytes_accessed=int(bytes_accessed))


def fused_encoder(x, pos, bias, params, h, d_kv):
    bs, n, dm = x.shape
    n_layers = params["w_qkv"].shape[0]
    dff = params["w1"].shape[-1]

    # whole (small) batch per grid step -> M = bs*n rows per MXU call; the
    # leading batch-block axis stays "parallel" for v7x dual-TC sharding.
    bb = bs
    grid = (bs // bb, n_layers)

    kernel = make_fused_encoder_kernel(h, d_kv, bb, n, dm, dff)

    # bf16 weights for the MXU; biases / LN params stay f32.
    w_qkv = params["w_qkv"].astype(jnp.bfloat16)
    w_o = params["w_o"].astype(jnp.bfloat16)
    w1 = params["w1"].astype(jnp.bfloat16)
    w2 = params["w2"].astype(jnp.bfloat16)

    in_specs = [
        pl.BlockSpec((bb, n, dm), lambda b, l: (b, 0, 0)),              # x (seed)
        pl.BlockSpec((bb, n, dm), lambda b, l: (b, 0, 0)),              # pos
        pl.BlockSpec((bb, h, n, n), lambda b, l: (b, 0, 0, 0)),         # geom+mask bias
        pl.BlockSpec((1, 3, h, dm, d_kv), lambda b, l: (l, 0, 0, 0, 0)),  # W_q/k/v per head
        pl.BlockSpec((1, h, d_kv, dm), lambda b, l: (l, 0, 0, 0)),      # W_o per head
        pl.BlockSpec((1, 3, h, d_kv), lambda b, l: (l, 0, 0, 0)),       # b_q/k/v
        pl.BlockSpec((1, 8, dm), lambda b, l: (l, 0, 0)),               # packed dm vectors
        pl.BlockSpec((1, dm, dff), lambda b, l: (l, 0, 0)),             # FFN W1
        pl.BlockSpec((1, 1, dff), lambda b, l: (l, 0, 0)),              # FFN b1
        pl.BlockSpec((1, dff, dm), lambda b, l: (l, 0, 0)),             # FFN W2
    ]

    return pl.pallas_call(
        kernel,
        out_shape=jax.ShapeDtypeStruct((bs, n, dm), jnp.float32),
        grid=grid,
        in_specs=in_specs,
        out_specs=pl.BlockSpec((bb, n, dm), lambda b, l: (b, 0, 0)),
        compiler_params=pltpu.CompilerParams(
            dimension_semantics=("parallel", "arbitrary"),
            vmem_limit_bytes=32 * 1024 * 1024),
        cost_estimate=_encoder_cost(bs, n, dm, h, d_kv, dff, n_layers),
    )(x, pos, bias, w_qkv, w_o, params["b_qkv"], params["vecs"], w1, params["b1"], w2)


# ----------------------------------------------------------------------------
# Full module forward
# ----------------------------------------------------------------------------
def multi_level_encoder_with_box(regions, boxes, region_embed, params,
                                 padding_idx=0, d_k=8, d_v=8):
    assert d_k == d_v, "packed per-head weight layout assumes d_k == d_v"
    bs, n, dm = regions.shape
    h = params["wg_w"].shape[0]

    # attention mask (cheap glue reduction)
    mask_bool = (jnp.sum(regions, axis=-1) == padding_idx)       # (bs, n)
    attention_mask = mask_bool[:, None, None, :]                 # (bs, 1, 1, n)
    mask_f = mask_bool.astype(jnp.float32)[:, None, :]           # (bs, 1, n)

    # geometry features (glue) + fused WG/ReLU/clamp/log/mask bias (Pallas)
    emb = box_relational_embedding(boxes)                        # (bs, n, n, 64)
    bias = geometry_bias(emb, mask_f, params["wg_w"], params["wg_b"])  # (bs, h, n, n)

    # fused N-layer encoder stack (single pallas_call)
    out = fused_encoder(regions, region_embed, bias, params, h, d_k)
    return out, attention_mask


# ----------------------------------------------------------------------------
# Deterministic parameter init (synthetic; matches module __init__ shapes,
# packed into stacked per-layer arrays)
# ----------------------------------------------------------------------------
def init_params(key, N, d_model, d_k, d_v, h, d_ff):
    assert d_k == d_v

    def nrm(k, shape, scale=0.05):
        return scale * jax.random.normal(k, shape, dtype=jnp.float32)

    k_wg, k_wgb, k_layers = jax.random.split(key, 3)
    params = {
        "wg_w": nrm(k_wg, (h, 64)),           # h x Linear(64, 1) stacked per head
        "wg_b": nrm(k_wgb, (h, 1, 1), 0.01),
    }

    ones = jnp.ones((d_model,), jnp.float32)
    zeros = jnp.zeros((d_model,), jnp.float32)
    lkeys = jax.random.split(k_layers, N)
    w_qkv, w_o, b_qkv, vecs, w1, b1, w2 = [], [], [], [], [], [], []
    for i in range(N):
        ks = jax.random.split(lkeys[i], 8)
        w_qkv.append(nrm(ks[0], (3, h, d_model, d_k)))
        w_o.append(nrm(ks[1], (h, d_v, d_model)))
        b_qkv.append(nrm(ks[2], (3, h, d_k), 0.01))
        b_o = nrm(ks[3], (d_model,), 0.01)
        w1.append(nrm(ks[4], (d_model, d_ff)))
        b1.append(nrm(ks[5], (1, d_ff), 0.01))
        w2.append(nrm(ks[6], (d_ff, d_model)))
        b2 = nrm(ks[7], (d_model,), 0.01)
        # rows: b_o, g_mh, b_mh, g_ln, b_ln, g_ff, b_ff, b2
        vecs.append(jnp.stack([b_o, ones, zeros, ones, zeros, ones, zeros, b2], axis=0))

    params.update(
        w_qkv=jnp.stack(w_qkv), w_o=jnp.stack(w_o), b_qkv=jnp.stack(b_qkv),
        vecs=jnp.stack(vecs), w1=jnp.stack(w1), b1=jnp.stack(b1), w2=jnp.stack(w2))
    return params


if __name__ == "__main__":
    # Small shapes consistent with the module's forward.
    N_LAYERS = 2
    BS, N_REG, D_MODEL = 2, 8, 32
    H, D_K, D_V, D_FF = 4, 8, 8, 64
    PADDING_IDX = 0

    root = jax.random.PRNGKey(0)
    k_reg, k_box1, k_box2, k_pos, k_par = jax.random.split(root, 5)

    regions = jax.random.normal(k_reg, (BS, N_REG, D_MODEL), dtype=jnp.float32)
    xy_min = jax.random.uniform(k_box1, (BS, N_REG, 2), dtype=jnp.float32) * 10.0
    wh = jax.random.uniform(k_box2, (BS, N_REG, 2), dtype=jnp.float32) * 5.0 + 0.5
    boxes = jnp.concatenate([xy_min, xy_min + wh], axis=-1)        # (BS, N_REG, 4)
    region_embed = jax.random.normal(k_pos, (BS, N_REG, D_MODEL), dtype=jnp.float32)

    params = init_params(k_par, N_LAYERS, D_MODEL, D_K, D_V, H, D_FF)

    out, attn_mask = multi_level_encoder_with_box(
        regions, boxes, region_embed, params, padding_idx=PADDING_IDX,
        d_k=D_K, d_v=D_V)
    jax.block_until_ready((out, attn_mask))

    assert out.shape == (BS, N_REG, D_MODEL)
    assert attn_mask.shape == (BS, 1, 1, N_REG)
    assert bool(jnp.all(jnp.isfinite(out)))
    print("KERNEL_OK")
</pallas_src>

<mosaic_0001>
module attributes {stable_mosaic.version = 11 : i64} {
  func.func @kernel(%arg0: i32, %arg1: memref<1x8x8x64xf32, #tpu.memory_space<vmem>>, %arg2: memref<1x1x8xf32, #tpu.memory_space<vmem>>, %arg3: memref<4x64xf32, #tpu.memory_space<vmem>>, %arg4: memref<4x1x1xf32, #tpu.memory_space<vmem>>, %arg5: memref<1x4x8x8xf32, #tpu.memory_space<vmem>>) attributes {dimension_semantics = [#tpu.dimension_semantics<parallel>], iteration_bounds = array<i64: 2>, scalar_prefetch = 0 : i64, scratch_operands = 0 : i64, tpu.core_type = #tpu.core_type<tc>, window_params = [{transform_indices = @transform_0, window_bounds = array<i64: 1, 8, 8, 64>}, {transform_indices = @transform_1, window_bounds = array<i64: 1, 1, 8>}, {pipeline_mode = #tpu.pipeline_mode<synchronous>, transform_indices = @transform_2, window_bounds = array<i64: 4, 64>}, {pipeline_mode = #tpu.pipeline_mode<synchronous>, transform_indices = @transform_3, window_bounds = array<i64: 4, 1, 1>}, {transform_indices = @transform_4, window_bounds = array<i64: 1, 4, 8, 8>}]} {
    %c0 = arith.constant 0 : index
    %c0_0 = arith.constant 0 : index
    %c0_1 = arith.constant 0 : index
    %c0_2 = arith.constant 0 : index
    %0 = vector.load %arg1[%c0, %c0_0, %c0_1, %c0_2] : memref<1x8x8x64xf32, #tpu.memory_space<vmem>>, vector<1x8x8x64xf32>
    %1 = vector.shape_cast %0 : vector<1x8x8x64xf32> to vector<8x8x64xf32>
    %c0_3 = arith.constant 0 : index
    %c0_4 = arith.constant 0 : index
    %c0_5 = arith.constant 0 : index
    %2 = vector.load %arg2[%c0_3, %c0_4, %c0_5] : memref<1x1x8xf32, #tpu.memory_space<vmem>>, vector<1x1x8xf32>
    %3 = vector.shape_cast %2 : vector<1x1x8xf32> to vector<1x8xf32>
    %cst = arith.constant 5.000000e-01 : f32
    %4 = vector.broadcast %cst : f32 to vector<1x8xf32>
    %5 = arith.cmpf ogt, %3, %4 : vector<1x8xf32>
    %cst_6 = arith.constant -1.000000e+30 : f32
    %cst_7 = arith.constant 0.000000e+00 : f32
    %6 = vector.broadcast %cst_6 : f32 to vector<1x8xf32>
    %7 = vector.broadcast %cst_7 : f32 to vector<1x8xf32>
    %8 = arith.select %5, %6, %7 : vector<1x8xi1>, vector<1x8xf32>
    %c0_8 = arith.constant 0 : index
    %c0_9 = arith.constant 0 : index
    %9 = vector.load %arg3[%c0_8, %c0_9] : memref<4x64xf32, #tpu.memory_space<vmem>>, vector<1x64xf32>
    %10 = vector.shape_cast %9 : vector<1x64xf32> to vector<64xf32>
    %11 = vector.shape_cast %10 : vector<64xf32> to vector<1x1x64xf32>
    %12 = vector.broadcast %11 : vector<1x1x64xf32> to vector<8x8x64xf32>
    %13 = arith.mulf %1, %12 : vector<8x8x64xf32>
    %cst_10 = arith.constant dense<0.000000e+00> : vector<8x8xf32>
    %14 = vector.multi_reduction <add>, %13, %cst_10 [2] : vector<8x8x64xf32> to vector<8x8xf32>
    %c0_11 = arith.constant 0 : index
    %c0_12 = arith.constant 0 : index
    %c0_13 = arith.constant 0 : index
    %15 = vector.load %arg4[%c0_11, %c0_12, %c0_13] : memref<4x1x1xf32, #tpu.memory_space<vmem>>, vector<1x1x1xf32>
    %16 = vector.shape_cast %15 : vector<1x1x1xf32> to vector<1x1xf32>
    %17 = vector.broadcast %16 : vector<1x1xf32> to vector<8x8xf32>
    %18 = arith.addf %14, %17 : vector<8x8xf32>
    %cst_14 = arith.constant 0.000000e+00 : f32
    %19 = vector.broadcast %cst_14 : f32 to vector<8x8xf32>
    %20 = arith.maximumf %18, %19 : vector<8x8xf32>
    %cst_15 = arith.constant 9.99999997E-7 : f32
    %21 = vector.broadcast %cst_15 : f32 to vector<8x8xf32>
    %22 = arith.maximumf %20, %21 : vector<8x8xf32>
    %23 = math.log %22 : vector<8x8xf32>
    %24 = vector.broadcast %8 : vector<1x8xf32> to vector<8x8xf32>
    %25 = arith.addf %23, %24 : vector<8x8xf32>
    %c0_16 = arith.constant 0 : index
    %c0_17 = arith.constant 0 : index
    %c0_18 = arith.constant 0 : index
    %c0_19 = arith.constant 0 : index
    %26 = vector.load %arg5[%c0_16, %c0_17, %c0_18, %c0_19] : memref<1x4x8x8xf32, #tpu.memory_space<vmem>>, vector<1x1x8x8xf32>
    %27 = vector.shape_cast %26 : vector<1x1x8x8xf32> to vector<8x8xf32>
    %28 = vector.shape_cast %25 : vector<8x8xf32> to vector<1x1x8x8xf32>
    tpu.vector_store %arg5[%c0_16, %c0_17, %c0_18, %c0_19], %28 {strides = array<i32>} : memref<1x4x8x8xf32, #tpu.memory_space<vmem>>, vector<1x1x8x8xf32>,
    %c1 = arith.constant 1 : index
    %c0_20 = arith.constant 0 : index
    %29 = vector.load %arg3[%c1, %c0_20] : memref<4x64xf32, #tpu.memory_space<vmem>>, vector<1x64xf32>
    %30 = vector.shape_cast %29 : vector<1x64xf32> to vector<64xf32>
    %31 = vector.shape_cast %30 : vector<64xf32> to vector<1x1x64xf32>
    %32 = vector.broadcast %31 : vector<1x1x64xf32> to vector<8x8x64xf32>
    %33 = arith.mulf %1, %32 : vector<8x8x64xf32>
    %cst_21 = arith.constant dense<0.000000e+00> : vector<8x8xf32>
    %34 = vector.multi_reduction <add>, %33, %cst_21 [2] : vector<8x8x64xf32> to vector<8x8xf32>
    %c1_22 = arith.constant 1 : index
    %c0_23 = arith.constant 0 : index
    %c0_24 = arith.constant 0 : index
    %35 = vector.load %arg4[%c1_22, %c0_23, %c0_24] : memref<4x1x1xf32, #tpu.memory_space<vmem>>, vector<1x1x1xf32>
    %36 = vector.shape_cast %35 : vector<1x1x1xf32> to vector<1x1xf32>
    %37 = vector.broadcast %36 : vector<1x1xf32> to vector<8x8xf32>
    %38 = arith.addf %34, %37 : vector<8x8xf32>
    %cst_25 = arith.constant 0.000000e+00 : f32
    %39 = vector.broadcast %cst_25 : f32 to vector<8x8xf32>
    %40 = arith.maximumf %38, %39 : vector<8x8xf32>
    %cst_26 = arith.constant 9.99999997E-7 : f32
    %41 = vector.broadcast %cst_26 : f32 to vector<8x8xf32>
    %42 = arith.maximumf %40, %41 : vector<8x8xf32>
    %43 = math.log %42 : vector<8x8xf32>
    %44 = vector.broadcast %8 : vector<1x8xf32> to vector<8x8xf32>
    %45 = arith.addf %43, %44 : vector<8x8xf32>
    %c0_27 = arith.constant 0 : index
    %c1_28 = arith.constant 1 : index
    %c0_29 = arith.constant 0 : index
    %c0_30 = arith.constant 0 : index
    %46 = vector.load %arg5[%c0_27, %c1_28, %c0_29, %c0_30] : memref<1x4x8x8xf32, #tpu.memory_space<vmem>>, vector<1x1x8x8xf32>
    %47 = vector.shape_cast %46 : vector<1x1x8x8xf32> to vector<8x8xf32>
    %48 = vector.shape_cast %45 : vector<8x8xf32> to vector<1x1x8x8xf32>
    tpu.vector_store %arg5[%c0_27, %c1_28, %c0_29, %c0_30], %48 {strides = array<i32>} : memref<1x4x8x8xf32, #tpu.memory_space<vmem>>, vector<1x1x8x8xf32>,
    %c2 = arith.constant 2 : index
    %c0_31 = arith.constant 0 : index
    %49 = vector.load %arg3[%c2, %c0_31] : memref<4x64xf32, #tpu.memory_space<vmem>>, vector<1x64xf32>
    %50 = vector.shape_cast %49 : vector<1x64xf32> to vector<64xf32>
    %51 = vector.shape_cast %50 : vector<64xf32> to vector<1x1x64xf32>
    %52 = vector.broadcast %51 : vector<1x1x64xf32> to vector<8x8x64xf32>
    %53 = arith.mulf %1, %52 : vector<8x8x64xf32>
    %cst_32 = arith.constant dense<0.000000e+00> : vector<8x8xf32>
    %54 = vector.multi_reduction <add>, %53, %cst_32 [2] : vector<8x8x64xf32> to vector<8x8xf32>
    %c2_33 = arith.constant 2 : index
    %c0_34 = arith.constant 0 : index
    %c0_35 = arith.constant 0 : index
    %55 = vector.load %arg4[%c2_33, %c0_34, %c0_35] : memref<4x1x1xf32, #tpu.memory_space<vmem>>, vector<1x1x1xf32>
    %56 = vector.shape_cast %55 : vector<1x1x1xf32> to vector<1x1xf32>
    %57 = vector.broadcast %56 : vector<1x1xf32> to vector<8x8xf32>
    %58 = arith.addf %54, %57 : vector<8x8xf32>
    %cst_36 = arith.constant 0.000000e+00 : f32
    %59 = vector.broadcast %cst_36 : f32 to vector<8x8xf32>
    %60 = arith.maximumf %58, %59 : vector<8x8xf32>
    %cst_37 = arith.constant 9.99999997E-7 : f32
    %61 = vector.broadcast %cst_37 : f32 to vector<8x8xf32>
    %62 = arith.maximumf %60, %61 : vector<8x8xf32>
    %63 = math.log %62 : vector<8x8xf32>
    %64 = vector.broadcast %8 : vector<1x8xf32> to vector<8x8xf32>
    %65 = arith.addf %63, %64 : vector<8x8xf32>
    %c0_38 = arith.constant 0 : index
    %c2_39 = arith.constant 2 : index
    %c0_40 = arith.constant 0 : index
    %c0_41 = arith.constant 0 : index
    %66 = vector.load %arg5[%c0_38, %c2_39, %c0_40, %c0_41] : memref<1x4x8x8xf32, #tpu.memory_space<vmem>>, vector<1x1x8x8xf32>
    %67 = vector.shape_cast %66 : vector<1x1x8x8xf32> to vector<8x8xf32>
    %68 = vector.shape_cast %65 : vector<8x8xf32> to vector<1x1x8x8xf32>
    tpu.vector_store %arg5[%c0_38, %c2_39, %c0_40, %c0_41], %68 {strides = array<i32>} : memref<1x4x8x8xf32, #tpu.memory_space<vmem>>, vector<1x1x8x8xf32>,
    %c3 = arith.constant 3 : index
    %c0_42 = arith.constant 0 : index
    %69 = vector.load %arg3[%c3, %c0_42] : memref<4x64xf32, #tpu.memory_space<vmem>>, vector<1x64xf32>
    %70 = vector.shape_cast %69 : vector<1x64xf32> to vector<64xf32>
    %71 = vector.shape_cast %70 : vector<64xf32> to vector<1x1x64xf32>
    %72 = vector.broadcast %71 : vector<1x1x64xf32> to vector<8x8x64xf32>
    %73 = arith.mulf %1, %72 : vector<8x8x64xf32>
    %cst_43 = arith.constant dense<0.000000e+00> : vector<8x8xf32>
    %74 = vector.multi_reduction <add>, %73, %cst_43 [2] : vector<8x8x64xf32> to vector<8x8xf32>
    %c3_44 = arith.constant 3 : index
    %c0_45 = arith.constant 0 : index
    %c0_46 = arith.constant 0 : index
    %75 = vector.load %arg4[%c3_44, %c0_45, %c0_46] : memref<4x1x1xf32, #tpu.memory_space<vmem>>, vector<1x1x1xf32>
    %76 = vector.shape_cast %75 : vector<1x1x1xf32> to vector<1x1xf32>
    %77 = vector.broadcast %76 : vector<1x1xf32> to vector<8x8xf32>
    %78 = arith.addf %74, %77 : vector<8x8xf32>
    %cst_47 = arith.constant 0.000000e+00 : f32
    %79 = vector.broadcast %cst_47 : f32 to vector<8x8xf32>
    %80 = arith.maximumf %78, %79 : vector<8x8xf32>
    %cst_48 = arith.constant 9.99999997E-7 : f32
    %81 = vector.broadcast %cst_48 : f32 to vector<8x8xf32>
    %82 = arith.maximumf %80, %81 : vector<8x8xf32>
    %83 = math.log %82 : vector<8x8xf32>
    %84 = vector.broadcast %8 : vector<1x8xf32> to vector<8x8xf32>
    %85 = arith.addf %83, %84 : vector<8x8xf32>
    %c0_49 = arith.constant 0 : index
    %c3_50 = arith.constant 3 : index
    %c0_51 = arith.constant 0 : index
    %c0_52 = arith.constant 0 : index
    %86 = vector.load %arg5[%c0_49, %c3_50, %c0_51, %c0_52] : memref<1x4x8x8xf32, #tpu.memory_space<vmem>>, vector<1x1x8x8xf32>
    %87 = vector.shape_cast %86 : vector<1x1x8x8xf32> to vector<8x8xf32>
    %88 = vector.shape_cast %85 : vector<8x8xf32> to vector<1x1x8x8xf32>
    tpu.vector_store %arg5[%c0_49, %c3_50, %c0_51, %c0_52], %88 {strides = array<i32>} : memref<1x4x8x8xf32, #tpu.memory_space<vmem>>, vector<1x1x8x8xf32>,
    return
  }
  func.func @transform_0(%arg0: i32) -> (i32, i32, i32, i32) {
    %c0_i32 = arith.constant 0 : i32
    %c0_i32_0 = arith.constant 0 : i32
    %c0_i32_1 = arith.constant 0 : i32
    %c0_i32_2 = arith.constant 0 : i32
    return %arg0, %c0_i32, %c0_i32_0, %c0_i32_1 : i32, i32, i32, i32
  }
  func.func @transform_1(%arg0: i32) -> (i32, i32, i32) {
    %c0_i32 = arith.constant 0 : i32
    %c0_i32_0 = arith.constant 0 : i32
    %c0_i32_1 = arith.constant 0 : i32
    return %arg0, %c0_i32, %c0_i32_0 : i32, i32, i32
  }
  func.func @transform_2(%arg0: i32) -> (i32, i32) {
    %c0_i32 = arith.constant 0 : i32
    %c0_i32_0 = arith.constant 0 : i32
    %c0_i32_1 = arith.constant 0 : i32
    return %c0_i32, %c0_i32_0 : i32, i32
  }
  func.func @transform_3(%arg0: i32) -> (i32, i32, i32) {
    %c0_i32 = arith.constant 0 : i32
    %c0_i32_0 = arith.constant 0 : i32
    %c0_i32_1 = arith.constant 0 : i32
    %c0_i32_2 = arith.constant 0 : i32
    return %c0_i32, %c0_i32_0, %c0_i32_1 : i32, i32, i32
  }
  func.func @transform_4(%arg0: i32) -> (i32, i32, i32, i32) {
    %c0_i32 = arith.constant 0 : i32
    %c0_i32_0 = arith.constant 0 : i32
    %c0_i32_1 = arith.constant 0 : i32
    %c0_i32_2 = arith.constant 0 : i32
    return %arg0, %c0_i32, %c0_i32_0, %c0_i32_1 : i32, i32, i32, i32
  }
}

</mosaic_0001>

<llo_original>
// kernel: tpu_custom_call.1
$region0: #{tpu_custom_call.1}
  #allocation0 [shape = 'u32[]', space=smem, size = 0x4, offset = 0x4, fixed_abs, tag = 'smem constant byte address 0x4 - core index']
  #allocation1 [shape = 'u32[144,128]{1,0:T(1,128)}', space=vmem, size = 0x12000, scoped, tag = 'internal scratch']
  %s0 = inlined_call_operand.hbm [shape: f32[2,8,8,64], index: 0, kind: input, shape index: {}]
  %s1 = inlined_call_operand.vmem [shape: f32[2,1,8], index: 1, kind: input, shape index: {}]
  %s2 = inlined_call_operand.vmem [shape: f32[4,64], index: 2, kind: input, shape index: {}]
  %s3 = inlined_call_operand.vmem [shape: f32[4,1,1], index: 3, kind: input, shape index: {}]
  %s4 = inlined_call_operand.hbm [shape: f32[2,4,8,8], index: 4, kind: output, shape index: {}]
  %s5 = sld [smem:[#allocation0]]
  $region53: #{tpu_custom_call.1} parent=0
    _
  %s7 = ssub.s32 1, %s5
  %s8 = scalar_select 0, %s7, %s5
  $region1: #{tpu_custom_call.1} parent=0
    #allocation2 [shape = 'u8[65536]{0}', space=vmem, size = 0x10000, scoped, tag = 'input window, operand 0']
    #allocation3 [shape = 's32[2]{0}', space=sflag, size = 0x8, scoped, tag = 'scoped memory for tpu_custom_call.1']
    #allocation4 [shape = 's32[2]{0}', space=sflag, size = 0x8, scoped, tag = 'scoped memory for tpu_custom_call.1']
    #allocation5 [shape = 'u8[32768]{0}', space=vmem, size = 0x8000, scoped, tag = 'output window, operand 0']
    %9 = vsyncpa [#allocation3], 0
    %s10 = scalar_lea.sflag [#allocation3], 1
    %11 = vsyncpa %s10, 0
    %12 = vsyncpa [#allocation4], 0
    %s13 = scalar_lea.sflag [#allocation4], 1
    %14 = vsyncpa %s13, 0
    loop: start=0, step=1, limit=4
    $region2: #{tpu_custom_call.1} parent=1 // loop_pre_header
      _
    $region3: #{tpu_custom_call.1} parent=1 // loop_header
      %s16 = sphi 0, %s20
      %p17 = scmp.ge.s32.totalorder %s16, 4
      %s26 = sphi 0, %s28
      %s29 = sphi 0, %s26
      %s30 = sphi 0, %s29
      %s46 = sphi 0, %s30
      %s52 = sphi 0, %s54
      %s55 = sphi 0, %s52
      %s56 = sphi 0, %s55
      %s72 = sphi 0, %s56
      %s76 = sphi 0, %s76
      %s78 = sphi 0, %s76
      %s79 = sphi 0, %s78
      %s93 = sphi 0, %s79
      %s97 = sphi 0, %s97
      %s99 = sphi 0, %s97
      %s100 = sphi 0, %s99
      %s114 = sphi 0, %s100
      %s120 = sphi 0, %s122
      %s123 = sphi 0, %s120
      %s124 = sphi 0, %s123
      %s140 = sphi 0, %s124
    $region4: #{tpu_custom_call.1} parent=1 // loop_header_branch
      %19 = sbr.rel (%p17) target = $region8
    $region5: #{tpu_custom_call.1} parent=1 // loop_body
      %s21 = ssub.s32 %s16, 1
      %s22 = ssub.s32 %s16, 2
      %s23 = sadd.s32 %s16, 1
      %s24 = ssub.s32 %s16, %s23
      %p25 = scmp.eq.s32.totalorder %s24, 0
      %s27 = sadd.s32 %s26, 1
      %s28 = scalar_select %p25, %s26, %s27
      %p31 = pneg %p25
      %p32 = scmp.eq.s32.totalorder %s16, 1
      %p33 = por %p31, %p32
      %p34 = scmp.ne.s32.totalorder %s26, %s29
      %p35 = scmp.eq.s32.totalorder %s16, 0
      %p36 = por %p34, %p35
      %p37 = scmp.ne.s32.totalorder %s26, %s29
      %p38 = scmp.eq.s32.totalorder %s21, 1
      %p39 = por %p37, %p38
      %p40 = scmp.ne.s32.totalorder %s29, %s30
      %p41 = scmp.eq.s32.totalorder %s21, 0
      %p42 = por %p40, %p41
      %p43 = scmp.ne.s32.totalorder %s29, %s30
      %p44 = scmp.eq.s32.totalorder %s22, 1
      %p45 = por %p43, %p44
      %p47 = scmp.ne.s32.totalorder %s30, %s46
      %p48 = scmp.eq.s32.totalorder %s22, 0
      %p49 = por %p47, %p48
      %s50 = ssub.s32 %s16, %s23
      %p51 = scmp.eq.s32.totalorder %s50, 0
      %s53 = sadd.s32 %s52, 1
      %s54 = scalar_select %p51, %s52, %s53
      %p57 = pneg %p51
      %p58 = scmp.eq.s32.totalorder %s16, 1
      %p59 = por %p57, %p58
      %p60 = scmp.ne.s32.totalorder %s52, %s55
      %p61 = scmp.eq.s32.totalorder %s16, 0
      %p62 = por %p60, %p61
      %p63 = scmp.ne.s32.totalorder %s52, %s55
      %p64 = scmp.eq.s32.totalorder %s21, 1
      %p65 = por %p63, %p64
      %p66 = scmp.ne.s32.totalorder %s55, %s56
      %p67 = scmp.eq.s32.totalorder %s21, 0
      %p68 = por %p66, %p67
      %p69 = scmp.ne.s32.totalorder %s55, %s56
      %p70 = scmp.eq.s32.totalorder %s22, 1
      %p71 = por %p69, %p70
      %p73 = scmp.ne.s32.totalorder %s56, %s72
      %p74 = scmp.eq.s32.totalorder %s22, 0
      %p75 = por %p73, %p74
      %s77 = sadd.s32 %s76, 1
      %p80 = scmp.eq.s32.totalorder %s16, 1
      %p81 = scmp.ne.s32.totalorder %s76, %s78
      %p82 = scmp.eq.s32.totalorder %s16, 0
      %p83 = por %p81, %p82
      %p84 = scmp.ne.s32.totalorder %s76, %s78
      %p85 = scmp.eq.s32.totalorder %s21, 1
      %p86 = por %p84, %p85
      %p87 = scmp.ne.s32.totalorder %s78, %s79
      %p88 = scmp.eq.s32.totalorder %s21, 0
      %p89 = por %p87, %p88
      %p90 = scmp.ne.s32.totalorder %s78, %s79
      %p91 = scmp.eq.s32.totalorder %s22, 1
      %p92 = por %p90, %p91
      %p94 = scmp.ne.s32.totalorder %s79, %s93
      %p95 = scmp.eq.s32.totalorder %s22, 0
      %p96 = por %p94, %p95
      %s98 = sadd.s32 %s97, 1
      %p101 = scmp.eq.s32.totalorder %s16, 1
      %p102 = scmp.ne.s32.totalorder %s97, %s99
      %p103 = scmp.eq.s32.totalorder %s16, 0
      %p104 = por %p102, %p103
      %p105 = scmp.ne.s32.totalorder %s97, %s99
      %p106 = scmp.eq.s32.totalorder %s21, 1
      %p107 = por %p105, %p106
      %p108 = scmp.ne.s32.totalorder %s99, %s100
      %p109 = scmp.eq.s32.totalorder %s21, 0
      %p110 = por %p108, %p109
      %p111 = scmp.ne.s32.totalorder %s99, %s100
      %p112 = scmp.eq.s32.totalorder %s22, 1
      %p113 = por %p111, %p112
      %p115 = scmp.ne.s32.totalorder %s100, %s114
      %p116 = scmp.eq.s32.totalorder %s22, 0
      %p117 = por %p115, %p116
      %s118 = ssub.s32 %s16, %s23
      %p119 = scmp.eq.s32.totalorder %s118, 0
      %s121 = sadd.s32 %s120, 1
      %s122 = scalar_select %p119, %s120, %s121
      %p125 = pneg %p119
      %p126 = scmp.eq.s32.totalorder %s16, 1
      %p127 = por %p125, %p126
      %p128 = scmp.ne.s32.totalorder %s120, %s123
      %p129 = scmp.eq.s32.totalorder %s16, 0
      %p130 = por %p128, %p129
      %p131 = scmp.ne.s32.totalorder %s120, %s123
      %p132 = scmp.eq.s32.totalorder %s21, 1
      %p133 = por %p131, %p132
      %p134 = scmp.ne.s32.totalorder %s123, %s124
      %p135 = scmp.eq.s32.totalorder %s21, 0
      %p136 = por %p134, %p135
      %p137 = scmp.ne.s32.totalorder %s123, %s124
      %p138 = scmp.eq.s32.totalorder %s22, 1
      %p139 = por %p137, %p138
      %p141 = scmp.ne.s32.totalorder %s124, %s140
      %p142 = scmp.eq.s32.totalorder %s22, 0
      %p143 = por %p141, %p142
      %p144 = scmp.le.s32.totalorder 1, %s16
      %p145 = scmp.lt.s32.totalorder %s16, 3
      %p146 = pnand %p144, %p145
      %p147 = pneg %p146
      // Predicated region
      $region9: #{tpu_custom_call.1} parent=5 // pred_check
        _
      $region10: #{tpu_custom_call.1} parent=5 // pred_check_branch
        %149 = sbr.rel (%p146) target = $region12
      $region11: #{tpu_custom_call.1} parent=5 // pred_region
        %s150 = ssub.s32 %s16, 1
        // Predicated region
        $region13: #{tpu_custom_call.1} parent=11 // pred_check
          %p151 = pneg %p89
        $region14: #{tpu_custom_call.1} parent=11 // pred_check_branch
          %153 = sbr.rel (%p151) target = $region16
        $region15: #{tpu_custom_call.1} parent=11 // pred_region
          _
        $region16: #{tpu_custom_call.1} parent=11 // pred_fallthru
          _
        // Predicated region
        $region17: #{tpu_custom_call.1} parent=11 // pred_check
          %p154 = pneg %p110
        $region18: #{tpu_custom_call.1} parent=11 // pred_check_branch
          %156 = sbr.rel (%p154) target = $region20
        $region19: #{tpu_custom_call.1} parent=11 // pred_region
          _
        $region20: #{tpu_custom_call.1} parent=11 // pred_fallthru
          _
      $region12: #{tpu_custom_call.1} parent=5 // pred_fallthru
        _
      %p157 = scmp.lt.s32.totalorder %s16, 2
      // Predicated region
      $region21: #{tpu_custom_call.1} parent=5 // pred_check
        %p158 = pneg %p157
      $region22: #{tpu_custom_call.1} parent=5 // pred_check_branch
        %160 = sbr.rel (%p158) target = $region24
      $region23: #{tpu_custom_call.1} parent=5 // pred_region
        // Predicated region
        $region25: #{tpu_custom_call.1} parent=23 // pred_check
          %p161 = pneg %p36
        $region26: #{tpu_custom_call.1} parent=23 // pred_check_branch
          %163 = sbr.rel (%p161) target = $region28
        $region27: #{tpu_custom_call.1} parent=23 // pred_region
          %s164 = sand.u32 %s26, 1
          %s165 = scalar_lea.sflag [#allocation3], %s164
          %s166 = sand.u32 %s26, 1
          %s167 = smul.addr %s166, 64
          %s168 = scalar_lea.vmem [#allocation2], %s167
          %s170 = ssub.s32 1024, 1024
          %171 = vsyncadd %s165, %s170
          %s172 = smul.addr %s16, 8
          %s173 = smul.addr %s172, 128
          %s174 = scalar_lea.hbm %s0, %s173
          %s175 = sshll.u32 %s168, 4
          %s176 = int_to_ptr.vmem [resolvable:$true] %s175
          %181 = dma.hbm_to_vmem [thread:$0]  %s174, 1024, %s176, %s165, 128, 128, 8
        $region28: #{tpu_custom_call.1} parent=23 // pred_fallthru
          _
        // Predicated region
        $region29: #{tpu_custom_call.1} parent=23 // pred_check
          %p182 = pneg %p62
        $region30: #{tpu_custom_call.1} parent=23 // pred_check_branch
          %184 = sbr.rel (%p182) target = $region32
        $region31: #{tpu_custom_call.1} parent=23 // pred_region
          %p185 = scmp.lt.s32.totalorder %s16, 1
          %s186 = scalar_select %p185, %s16, 1
          %s187 = scalar_lea.vmem %s1, %s186
        $region32: #{tpu_custom_call.1} parent=23 // pred_fallthru
          _
      $region24: #{tpu_custom_call.1} parent=5 // pred_fallthru
        _
      %p188 = scmp.le.s32.totalorder 1, %s16
      %p189 = scmp.lt.s32.totalorder %s16, 3
      %p190 = pnand %p188, %p189
      %p191 = pneg %p190
      // Predicated region
      $region33: #{tpu_custom_call.1} parent=5 // pred_check
        _
      $region34: #{tpu_custom_call.1} parent=5 // pred_check_branch
        %193 = sbr.rel (%p190) target = $region36
      $region35: #{tpu_custom_call.1} parent=5 // pred_region
        %s194 = ssub.s32 %s16, 1
        %s195 = sand.u32 %s29, 1
        %s196 = scalar_lea.sflag [#allocation3], %s195
        %s197 = sand.u32 %s29, 1
        %s198 = smul.addr %s197, 64
        %s199 = scalar_lea.vmem [#allocation2], %s198
        // Predicated region
        $region37: #{tpu_custom_call.1} parent=35 // pred_check
          %p200 = pneg %p42
        $region38: #{tpu_custom_call.1} parent=35 // pred_check_branch
          %202 = sbr.rel (%p200) target = $region40
        $region39: #{tpu_custom_call.1} parent=35 // pred_region
          %203 = dma.done %s196, 1024
        $region40: #{tpu_custom_call.1} parent=35 // pred_fallthru
          _
        %s204 = sand.u32 %s29, 1
        %s205 = scalar_lea.sflag [#allocation3], %s204
        %s206 = sand.u32 %s29, 1
        %s207 = smul.addr %s206, 64
        %s208 = scalar_lea.vmem [#allocation2], %s207
        %p209 = pneg %p42
        %p210 = pneg %p39
        %p211 = scmp.lt.s32.totalorder %s21, 1
        %s212 = scalar_select %p211, %s21, 1
        %s213 = scalar_lea.vmem %s1, %s212
        %p214 = pneg %p68
        %p215 = pneg %p65
        %p216 = pneg %p89
        %p217 = pneg %p86
        %p218 = pneg %p110
        %p219 = pneg %p107
        %p220 = pneg %p136
        %p221 = pneg %p133
        %s222 = sand.u32 %s123, 1
        %s223 = scalar_lea.sflag [#allocation4], %s222
        %s224 = sand.u32 %s123, 1
        %s225 = smul.addr %s224, 32
        %s226 = scalar_lea.vmem [#allocation5], %s225
        %p227 = scmp.lt.s32.totalorder %s21, 1
        %s228 = scalar_select %p227, %s21, 1
        %s229 = scalar_lea.vmem %s1, %s228
        %v230 = vld [vmem:[%s199] sm:$0xff]
        %v231 = vld [vmem:[%s199 + $0x8] sm:$0xff]
        %v232 = vld [vmem:[%s199 + $0x10] sm:$0xff]
        %v233 = vld [vmem:[%s199 + $0x18] sm:$0xff]
        %v234 = vld [vmem:[%s199 + $0x20] sm:$0xff]
        %v235 = vld [vmem:[%s199 + $0x28] sm:$0xff]
        %v236 = vld [vmem:[%s199 + $0x30] sm:$0xff]
        %v237 = vld [vmem:[%s199 + $0x38] sm:$0xff]
        %v238 = vld [vmem:[%s229] sm:$0x1]
        %vm239 = vcmp.gt.f32.partialorder %v238, 0.5
        %v240 = vsel %vm239, -1e+30, 0.0
        %v241 = vld [vmem:[%s2] sm:$0x1]
        %v242 = vlaneseq
        %v243 = vshrl.u32 %v242, 7
        %v244 = vsub.s32 0, %v243
        %v245 = vrot.slane %v241, %v244
        %v246 = vmul.f32 %v230, %v245
        %v247 = vmul.f32 %v231, %v245
        %v248 = vmul.f32 %v232, %v245
        %v249 = vmul.f32 %v233, %v245
        %v250 = vmul.f32 %v234, %v245
        %v251 = vmul.f32 %v235, %v245
        %v252 = vmul.f32 %v236, %v245
        %v253 = vmul.f32 %v237, %v245
        %vm254 = vcmask 523264
        %v255 = vsel %vm254, %v246, 0.0
        %256 = vadd.xlane.f32.xlu0 %v255
        %v257 = vpop.xlane.xlu0 %256
        %v258 = vsel %vm254, %v247, 0.0
        %259 = vadd.xlane.f32.xlu0 %v258
        %v260 = vpop.xlane.xlu0 %259
        %v261 = vsel %vm254, %v248, 0.0
        %262 = vadd.xlane.f32.xlu0 %v261
        %v263 = vpop.xlane.xlu0 %262
        %v264 = vsel %vm254, %v249, 0.0
        %265 = vadd.xlane.f32.xlu0 %v264
        %v266 = vpop.xlane.xlu0 %265
        %v267 = vsel %vm254, %v250, 0.0
        %268 = vadd.xlane.f32.xlu0 %v267
        %v269 = vpop.xlane.xlu0 %268
        %v270 = vsel %vm254, %v251, 0.0
        %271 = vadd.xlane.f32.xlu0 %v270
        %v272 = vpop.xlane.xlu0 %271
        %v273 = vsel %vm254, %v252, 0.0
        %274 = vadd.xlane.f32.xlu0 %v273
        %v275 = vpop.xlane.xlu0 %274
        %v276 = vsel %vm254, %v253, 0.0
        %277 = vadd.xlane.f32.xlu0 %v276
        %v278 = vpop.xlane.xlu0 %277
        %v279 = vld [vmem:[%s3] sm:$0x1]
        %v281 = vlaneseq
        %v282 = vshrl.u32 %v281, 7
        %v283 = vsub.s32 0, %v282
        %v284 = vrot.slane %v279, %v283
        %285 = vset.pattern.permute.xlu0 0
        %286 = vperm.xlu0 %285, %v284
        %v287 = vpop.permute.xlu0 %286
        %v289 = vadd.f32 %v257, %v287
        %v290 = vadd.f32 %v260, %v287
        %v291 = vadd.f32 %v263, %v287
        %v292 = vadd.f32 %v266, %v287
        %v293 = vadd.f32 %v269, %v287
        %v294 = vadd.f32 %v272, %v287
        %v295 = vadd.f32 %v275, %v287
        %v296 = vadd.f32 %v278, %v287
        %v297 = vmax.f32 %v289, 0.0
        %v298 = vmax.f32 %v290, 0.0
        %v299 = vmax.f32 %v291, 0.0
        %v300 = vmax.f32 %v292, 0.0
        %v301 = vmax.f32 %v293, 0.0
        %v302 = vmax.f32 %v294, 0.0
        %v303 = vmax.f32 %v295, 0.0
        %v304 = vmax.f32 %v296, 0.0
        %v305 = vmax.f32 %v297, 1e-06
        %v306 = vmax.f32 %v298, 1e-06
        %v307 = vmax.f32 %v299, 1e-06
        %v308 = vmax.f32 %v300, 1e-06
        %v309 = vmax.f32 %v301, 1e-06
        %v310 = vmax.f32 %v302, 1e-06
        %v311 = vmax.f32 %v303, 1e-06
        %v312 = vmax.f32 %v304, 1e-06
        %v313 = vlog2.pop %v305
        %v314 = vmul.f32 %v313, 0.6931472
        %v315 = vlog2.pop %v306
        %v316 = vmul.f32 %v315, 0.6931472
        %v317 = vlog2.pop %v307
        %v318 = vmul.f32 %v317, 0.6931472
        %v319 = vlog2.pop %v308
        %v320 = vmul.f32 %v319, 0.6931472
        %v321 = vlog2.pop %v309
        %v322 = vmul.f32 %v321, 0.6931472
        %v323 = vlog2.pop %v310
        %v324 = vmul.f32 %v323, 0.6931472
        %v325 = vlog2.pop %v311
        %v326 = vmul.f32 %v325, 0.6931472
        %v327 = vlog2.pop %v312
        %v328 = vmul.f32 %v327, 0.6931472
        %v330 = vlaneseq
        %v331 = vshrl.u32 %v330, 7
        %v332 = vsub.s32 0, %v331
        %v333 = vrot.slane %v240, %v332
        %335 = vbcast.lane.b32.xlu0 %v333, 256
        %v336 = vpop.permute.xlu0 %335
        %v338 = vadd.f32 %v314, %v336
        %v339 = vadd.f32 %v316, %v336
        %v340 = vadd.f32 %v318, %v336
        %v341 = vadd.f32 %v320, %v336
        %v342 = vadd.f32 %v322, %v336
        %v343 = vadd.f32 %v324, %v336
        %v344 = vadd.f32 %v326, %v336
        %v345 = vadd.f32 %v328, %v336
        %354 = vset.pattern.permute.xlu0 0
        %355 = vperm.xlu0 %354, %v338
        %v356 = vpop.permute.xlu0 %355
        %357 = vset.pattern.permute.xlu0 0
        %358 = vperm.xlu0 %357, %v339
        %v359 = vpop.permute.xlu0 %358
        %360 = vset.pattern.permute.xlu0 0
        %361 = vperm.xlu0 %360, %v340
        %v362 = vpop.permute.xlu0 %361
        %363 = vset.pattern.permute.xlu0 0
        %364 = vperm.xlu0 %363, %v341
        %v365 = vpop.permute.xlu0 %364
        %366 = vset.pattern.permute.xlu0 0
        %367 = vperm.xlu0 %366, %v342
        %v368 = vpop.permute.xlu0 %367
        %369 = vset.pattern.permute.xlu0 0
        %370 = vperm.xlu0 %369, %v343
        %v371 = vpop.permute.xlu0 %370
        %372 = vset.pattern.permute.xlu0 0
        %373 = vperm.xlu0 %372, %v344
        %v374 = vpop.permute.xlu0 %373
        %375 = vset.pattern.permute.xlu0 0
        %376 = vperm.xlu0 %375, %v345
        %v377 = vpop.permute.xlu0 %376
        %v378 = vlaneseq
        %v379 = vand.u32 %v378, 127
        %v380 = vlaneseq
        %v381 = vshrl.u32 %v380, 7
        %v382 = vsub.s32 %v379, %v381
        %v383 = vrot.slane %v356, %v382
        %v384 = vlaneseq
        %v385 = vshrl.u32 %v384, 7
        %v386 = vsub.s32 %v379, %v385
        %v387 = vrot.slane %v359, %v386
        %v388 = vlaneseq
        %v389 = vshrl.u32 %v388, 7
        %v390 = vsub.s32 %v379, %v389
        %v391 = vrot.slane %v362, %v390
        %v392 = vlaneseq
        %v393 = vshrl.u32 %v392, 7
        %v394 = vsub.s32 %v379, %v393
        %v395 = vrot.slane %v365, %v394
        %v396 = vlaneseq
        %v397 = vshrl.u32 %v396, 7
        %v398 = vsub.s32 %v379, %v397
        %v399 = vrot.slane %v368, %v398
        %v400 = vlaneseq
        %v401 = vshrl.u32 %v400, 7
        %v402 = vsub.s32 %v379, %v401
        %v403 = vrot.slane %v371, %v402
        %v404 = vlaneseq
        %v405 = vshrl.u32 %v404, 7
        %v406 = vsub.s32 %v379, %v405
        %v407 = vrot.slane %v374, %v406
        %v408 = vlaneseq
        %v409 = vshrl.u32 %v408, 7
        %v410 = vsub.s32 %v379, %v409
        %v411 = vrot.slane %v377, %v410
        %vm412 = vcmask 1041409
        %v413 = vsel %vm412, %v387, %v383
        %vm414 = vcmask 1042434
        %v415 = vsel %vm414, %v391, %v413
        %vm416 = vcmask 1043459
        %v417 = vsel %vm416, %v395, %v415
        %vm418 = vcmask 1044484
        %v419 = vsel %vm418, %v399, %v417
        %vm420 = vcmask 1045509
        %v421 = vsel %vm420, %v403, %v419
        %vm422 = vcmask 1046534
        %v423 = vsel %vm422, %v407, %v421
        %vm424 = vcmask 1047559
        %v425 = vsel %vm424, %v411, %v423
        %vm427 = vcmask 64512
        %428 = vst.msk [vmem:[%s226] sm:$0xff] %vm427, %v425
        %v429 = vld [vmem:[%s2 + $0x1] sm:$0x1]
        %v430 = vlaneseq
        %v431 = vshrl.u32 %v430, 7
        %v432 = vsub.s32 0, %v431
        %v433 = vrot.slane %v429, %v432
        %v434 = vmul.f32 %v230, %v433
        %v435 = vmul.f32 %v231, %v433
        %v436 = vmul.f32 %v232, %v433
        %v437 = vmul.f32 %v233, %v433
        %v438 = vmul.f32 %v234, %v433
        %v439 = vmul.f32 %v235, %v433
        %v440 = vmul.f32 %v236, %v433
        %v441 = vmul.f32 %v237, %v433
        %v442 = vsel %vm254, %v434, 0.0
        %443 = vadd.xlane.f32.xlu0 %v442
        %v444 = vpop.xlane.xlu0 %443
        %v445 = vsel %vm254, %v435, 0.0
        %446 = vadd.xlane.f32.xlu0 %v445
        %v447 = vpop.xlane.xlu0 %446
        %v448 = vsel %vm254, %v436, 0.0
        %449 = vadd.xlane.f32.xlu0 %v448
        %v450 = vpop.xlane.xlu0 %449
        %v451 = vsel %vm254, %v437, 0.0
        %452 = vadd.xlane.f32.xlu0 %v451
        %v453 = vpop.xlane.xlu0 %452
        %v454 = vsel %vm254, %v438, 0.0
        %455 = vadd.xlane.f32.xlu0 %v454
        %v456 = vpop.xlane.xlu0 %455
        %v457 = vsel %vm254, %v439, 0.0
        %458 = vadd.xlane.f32.xlu0 %v457
        %v459 = vpop.xlane.xlu0 %458
        %v460 = vsel %vm254, %v440, 0.0
        %461 = vadd.xlane.f32.xlu0 %v460
        %v462 = vpop.xlane.xlu0 %461
        %v463 = vsel %vm254, %v441, 0.0
        %464 = vadd.xlane.f32.xlu0 %v463
        %v465 = vpop.xlane.xlu0 %464
        %s466 = scalar_lea.vmem %s3, 1
        %v467 = vld [vmem:[%s466] sm:$0x1]
        %v469 = vlaneseq
        %v470 = vshrl.u32 %v469, 7
        %v471 = vsub.s32 0, %v470
        %v472 = vrot.slane %v467, %v471
        %473 = vset.pattern.permute.xlu0 0
        %474 = vperm.xlu0 %473, %v472
        %v475 = vpop.permute.xlu0 %474
        %v477 = vadd.f32 %v444, %v475
        %v478 = vadd.f32 %v447, %v475
        %v479 = vadd.f32 %v450, %v475
        %v480 = vadd.f32 %v453, %v475
        %v481 = vadd.f32 %v456, %v475
        %v482 = vadd.f32 %v459, %v475
        %v483 = vadd.f32 %v462, %v475
        %v484 = vadd.f32 %v465, %v475
        %v485 = vmax.f32 %v477, 0.0
        %v486 = vmax.f32 %v478, 0.0
        %v487 = vmax.f32 %v479, 0.0
        %v488 = vmax.f32 %v480, 0.0
        %v489 = vmax.f32 %v481, 0.0
        %v490 = vmax.f32 %v482, 0.0
        %v491 = vmax.f32 %v483, 0.0
        %v492 = vmax.f32 %v484, 0.0
        %v493 = vmax.f32 %v485, 1e-06
        %v494 = vmax.f32 %v486, 1e-06
        %v495 = vmax.f32 %v487, 1e-06
        %v496 = vmax.f32 %v488, 1e-06
        %v497 = vmax.f32 %v489, 1e-06
        %v498 = vmax.f32 %v490, 1e-06
        %v499 = vmax.f32 %v491, 1e-06
        %v500 = vmax.f32 %v492, 1e-06
        %v501 = vlog2.pop %v493
        %v502 = vmul.f32 %v501, 0.6931472
        %v503 = vlog2.pop %v494
        %v504 = vmul.f32 %v503, 0.6931472
        %v505 = vlog2.pop %v495
        %v506 = vmul.f32 %v505, 0.6931472
        %v507 = vlog2.pop %v496
        %v508 = vmul.f32 %v507, 0.6931472
        %v509 = vlog2.pop %v497
        %v510 = vmul.f32 %v509, 0.6931472
        %v511 = vlog2.pop %v498
        %v512 = vmul.f32 %v511, 0.6931472
        %v513 = vlog2.pop %v499
        %v514 = vmul.f32 %v513, 0.6931472
        %v515 = vlog2.pop %v500
        %v516 = vmul.f32 %v515, 0.6931472
        %v517 = vadd.f32 %v502, %v336
        %v518 = vadd.f32 %v504, %v336
        %v519 = vadd.f32 %v506, %v336
        %v520 = vadd.f32 %v508, %v336
        %v521 = vadd.f32 %v510, %v336
        %v522 = vadd.f32 %v512, %v336
        %v523 = vadd.f32 %v514, %v336
        %v524 = vadd.f32 %v516, %v336
        %533 = vset.pattern.permute.xlu0 0
        %534 = vperm.xlu0 %533, %v517
        %v535 = vpop.permute.xlu0 %534
        %536 = vset.pattern.permute.xlu0 0
        %537 = vperm.xlu0 %536, %v518
        %v538 = vpop.permute.xlu0 %537
        %539 = vset.pattern.permute.xlu0 0
        %540 = vperm.xlu0 %539, %v519
        %v541 = vpop.permute.xlu0 %540
        %542 = vset.pattern.permute.xlu0 0
        %543 = vperm.xlu0 %542, %v520
        %v544 = vpop.permute.xlu0 %543
        %545 = vset.pattern.permute.xlu0 0
        %546 = vperm.xlu0 %545, %v521
        %v547 = vpop.permute.xlu0 %546
        %548 = vset.pattern.permute.xlu0 0
        %549 = vperm.xlu0 %548, %v522
        %v550 = vpop.permute.xlu0 %549
        %551 = vset.pattern.permute.xlu0 0
        %552 = vperm.xlu0 %551, %v523
        %v553 = vpop.permute.xlu0 %552
        %554 = vset.pattern.permute.xlu0 0
        %555 = vperm.xlu0 %554, %v524
        %v556 = vpop.permute.xlu0 %555
        %v557 = vlaneseq
        %v558 = vshrl.u32 %v557, 7
        %v559 = vsub.s32 %v379, %v558
        %v560 = vrot.slane %v535, %v559
        %v561 = vlaneseq
        %v562 = vshrl.u32 %v561, 7
        %v563 = vsub.s32 %v379, %v562
        %v564 = vrot.slane %v538, %v563
        %v565 = vlaneseq
        %v566 = vshrl.u32 %v565, 7
        %v567 = vsub.s32 %v379, %v566
        %v568 = vrot.slane %v541, %v567
        %v569 = vlaneseq
        %v570 = vshrl.u32 %v569, 7
        %v571 = vsub.s32 %v379, %v570
        %v572 = vrot.slane %v544, %v571
        %v573 = vlaneseq
        %v574 = vshrl.u32 %v573, 7
        %v575 = vsub.s32 %v379, %v574
        %v576 = vrot.slane %v547, %v575
        %v577 = vlaneseq
        %v578 = vshrl.u32 %v577, 7
        %v579 = vsub.s32 %v379, %v578
        %v580 = vrot.slane %v550, %v579
        %v581 = vlaneseq
        %v582 = vshrl.u32 %v581, 7
        %v583 = vsub.s32 %v379, %v582
        %v584 = vrot.slane %v553, %v583
        %v585 = vlaneseq
        %v586 = vshrl.u32 %v585, 7
        %v587 = vsub.s32 %v379, %v586
        %v588 = vrot.slane %v556, %v587
        %v589 = vsel %vm412, %v564, %v560
        %v590 = vsel %vm414, %v568, %v589
        %v591 = vsel %vm416, %v572, %v590
        %v592 = vsel %vm418, %v576, %v591
        %v593 = vsel %vm420, %v580, %v592
        %v594 = vsel %vm422, %v584, %v593
        %v595 = vsel %vm424, %v588, %v594
        %s597 = scalar_lea.vmem %s226, 8 [#allocation5]
        %598 = vst.msk [vmem:[%s597] sm:$0xff] %vm427, %v595
        %v599 = vld [vmem:[%s2 + $0x2] sm:$0x1]
        %v600 = vlaneseq
        %v601 = vshrl.u32 %v600, 7
        %v602 = vsub.s32 0, %v601
        %v603 = vrot.slane %v599, %v602
        %v604 = vmul.f32 %v230, %v603
        %v605 = vmul.f32 %v231, %v603
        %v606 = vmul.f32 %v232, %v603
        %v607 = vmul.f32 %v233, %v603
        %v608 = vmul.f32 %v234, %v603
        %v609 = vmul.f32 %v235, %v603
        %v610 = vmul.f32 %v236, %v603
        %v611 = vmul.f32 %v237, %v603
        %v612 = vsel %vm254, %v604, 0.0
        %613 = vadd.xlane.f32.xlu0 %v612
        %v614 = vpop.xlane.xlu0 %613
        %v615 = vsel %vm254, %v605, 0.0
        %616 = vadd.xlane.f32.xlu0 %v615
        %v617 = vpop.xlane.xlu0 %616
        %v618 = vsel %vm254, %v606, 0.0
        %619 = vadd.xlane.f32.xlu0 %v618
        %v620 = vpop.xlane.xlu0 %619
        %v621 = vsel %vm254, %v607, 0.0
        %622 = vadd.xlane.f32.xlu0 %v621
        %v623 = vpop.xlane.xlu0 %622
        %v624 = vsel %vm254, %v608, 0.0
        %625 = vadd.xlane.f32.xlu0 %v624
        %v626 = vpop.xlane.xlu0 %625
        %v627 = vsel %vm254, %v609, 0.0
        %628 = vadd.xlane.f32.xlu0 %v627
        %v629 = vpop.xlane.xlu0 %628
        %v630 = vsel %vm254, %v610, 0.0
        %631 = vadd.xlane.f32.xlu0 %v630
        %v632 = vpop.xlane.xlu0 %631
        %v633 = vsel %vm254, %v611, 0.0
        %634 = vadd.xlane.f32.xlu0 %v633
        %v635 = vpop.xlane.xlu0 %634
        %s636 = scalar_lea.vmem %s3, 2
        %v637 = vld [vmem:[%s636] sm:$0x1]
        %v639 = vlaneseq
        %v640 = vshrl.u32 %v639, 7
        %v641 = vsub.s32 0, %v640
        %v642 = vrot.slane %v637, %v641
        %643 = vset.pattern.permute.xlu0 0
        %644 = vperm.xlu0 %643, %v642
        %v645 = vpop.permute.xlu0 %644
        %v647 = vadd.f32 %v614, %v645
        %v648 = vadd.f32 %v617, %v645
        %v649 = vadd.f32 %v620, %v645
        %v650 = vadd.f32 %v623, %v645
        %v651 = vadd.f32 %v626, %v645
        %v652 = vadd.f32 %v629, %v645
        %v653 = vadd.f32 %v632, %v645
        %v654 = vadd.f32 %v635, %v645
        %v655 = vmax.f32 %v647, 0.0
        %v656 = vmax.f32 %v648, 0.0
        %v657 = vmax.f32 %v649, 0.0
        %v658 = vmax.f32 %v650, 0.0
        %v659 = vmax.f32 %v651, 0.0
        %v660 = vmax.f32 %v652, 0.0
        %v661 = vmax.f32 %v653, 0.0
        %v662 = vmax.f32 %v654, 0.0
        %v663 = vmax.f32 %v655, 1e-06
        %v664 = vmax.f32 %v656, 1e-06
        %v665 = vmax.f32 %v657, 1e-06
        %v666 = vmax.f32 %v658, 1e-06
        %v667 = vmax.f32 %v659, 1e-06
        %v668 = vmax.f32 %v660, 1e-06
        %v669 = vmax.f32 %v661, 1e-06
        %v670 = vmax.f32 %v662, 1e-06
        %v671 = vlog2.pop %v663
        %v672 = vmul.f32 %v671, 0.6931472
        %v673 = vlog2.pop %v664
        %v674 = vmul.f32 %v673, 0.6931472
        %v675 = vlog2.pop %v665
        %v676 = vmul.f32 %v675, 0.6931472
        %v677 = vlog2.pop %v666
        %v678 = vmul.f32 %v677, 0.6931472
        %v679 = vlog2.pop %v667
        %v680 = vmul.f32 %v679, 0.6931472
        %v681 = vlog2.pop %v668
        %v682 = vmul.f32 %v681, 0.6931472
        %v683 = vlog2.pop %v669
        %v684 = vmul.f32 %v683, 0.6931472
        %v685 = vlog2.pop %v670
        %v686 = vmul.f32 %v685, 0.6931472
        %v687 = vadd.f32 %v672, %v336
        %v688 = vadd.f32 %v674, %v336
        %v689 = vadd.f32 %v676, %v336
        %v690 = vadd.f32 %v678, %v336
        %v691 = vadd.f32 %v680, %v336
        %v692 = vadd.f32 %v682, %v336
        %v693 = vadd.f32 %v684, %v336
        %v694 = vadd.f32 %v686, %v336
        %703 = vset.pattern.permute.xlu0 0
        %704 = vperm.xlu0 %703, %v687
        %v705 = vpop.permute.xlu0 %704
        %706 = vset.pattern.permute.xlu0 0
        %707 = vperm.xlu0 %706, %v688
        %v708 = vpop.permute.xlu0 %707
        %709 = vset.pattern.permute.xlu0 0
        %710 = vperm.xlu0 %709, %v689
        %v711 = vpop.permute.xlu0 %710
        %712 = vset.pattern.permute.xlu0 0
        %713 = vperm.xlu0 %712, %v690
        %v714 = vpop.permute.xlu0 %713
        %715 = vset.pattern.permute.xlu0 0
        %716 = vperm.xlu0 %715, %v691
        %v717 = vpop.permute.xlu0 %716
        %718 = vset.pattern.permute.xlu0 0
        %719 = vperm.xlu0 %718, %v692
        %v720 = vpop.permute.xlu0 %719
        %721 = vset.pattern.permute.xlu0 0
        %722 = vperm.xlu0 %721, %v693
        %v723 = vpop.permute.xlu0 %722
        %724 = vset.pattern.permute.xlu0 0
        %725 = vperm.xlu0 %724, %v694
        %v726 = vpop.permute.xlu0 %725
        %v727 = vlaneseq
        %v728 = vshrl.u32 %v727, 7
        %v729 = vsub.s32 %v379, %v728
        %v730 = vrot.slane %v705, %v729
        %v731 = vlaneseq
        %v732 = vshrl.u32 %v731, 7
        %v733 = vsub.s32 %v379, %v732
        %v734 = vrot.slane %v708, %v733
        %v735 = vlaneseq
        %v736 = vshrl.u32 %v735, 7
        %v737 = vsub.s32 %v379, %v736
        %v738 = vrot.slane %v711, %v737
        %v739 = vlaneseq
        %v740 = vshrl.u32 %v739, 7
        %v741 = vsub.s32 %v379, %v740
        %v742 = vrot.slane %v714, %v741
        %v743 = vlaneseq
        %v744 = vshrl.u32 %v743, 7
        %v745 = vsub.s32 %v379, %v744
        %v746 = vrot.slane %v717, %v745
        %v747 = vlaneseq
        %v748 = vshrl.u32 %v747, 7
        %v749 = vsub.s32 %v379, %v748
        %v750 = vrot.slane %v720, %v749
        %v751 = vlaneseq
        %v752 = vshrl.u32 %v751, 7
        %v753 = vsub.s32 %v379, %v752
        %v754 = vrot.slane %v723, %v753
        %v755 = vlaneseq
        %v756 = vshrl.u32 %v755, 7
        %v757 = vsub.s32 %v379, %v756
        %v758 = vrot.slane %v726, %v757
        %v759 = vsel %vm412, %v734, %v730
        %v760 = vsel %vm414, %v738, %v759
        %v761 = vsel %vm416, %v742, %v760
        %v762 = vsel %vm418, %v746, %v761
        %v763 = vsel %vm420, %v750, %v762
        %v764 = vsel %vm422, %v754, %v763
        %v765 = vsel %vm424, %v758, %v764
        %s767 = scalar_lea.vmem %s226, 16 [#allocation5]
        %768 = vst.msk [vmem:[%s767] sm:$0xff] %vm427, %v765
        %v769 = vld [vmem:[%s2 + $0x3] sm:$0x1]
        %v770 = vlaneseq
        %v771 = vshrl.u32 %v770, 7
        %v772 = vsub.s32 0, %v771
        %v773 = vrot.slane %v769, %v772
        %v774 = vmul.f32 %v230, %v773
        %v775 = vmul.f32 %v231, %v773
        %v776 = vmul.f32 %v232, %v773
        %v777 = vmul.f32 %v233, %v773
        %v778 = vmul.f32 %v234, %v773
        %v779 = vmul.f32 %v235, %v773
        %v780 = vmul.f32 %v236, %v773
        %v781 = vmul.f32 %v237, %v773
        %v782 = vsel %vm254, %v774, 0.0
        %783 = vadd.xlane.f32.xlu0 %v782
        %v784 = vpop.xlane.xlu0 %783
        %v785 = vsel %vm254, %v775, 0.0
        %786 = vadd.xlane.f32.xlu0 %v785
        %v787 = vpop.xlane.xlu0 %786
        %v788 = vsel %vm254, %v776, 0.0
        %789 = vadd.xlane.f32.xlu0 %v788
        %v790 = vpop.xlane.xlu0 %789
        %v791 = vsel %vm254, %v777, 0.0
        %792 = vadd.xlane.f32.xlu0 %v791
        %v793 = vpop.xlane.xlu0 %792
        %v794 = vsel %vm254, %v778, 0.0
        %795 = vadd.xlane.f32.xlu0 %v794
        %v796 = vpop.xlane.xlu0 %795
        %v797 = vsel %vm254, %v779, 0.0
        %798 = vadd.xlane.f32.xlu0 %v797
        %v799 = vpop.xlane.xlu0 %798
        %v800 = vsel %vm254, %v780, 0.0
        %801 = vadd.xlane.f32.xlu0 %v800
        %v802 = vpop.xlane.xlu0 %801
        %v803 = vsel %vm254, %v781, 0.0
        %804 = vadd.xlane.f32.xlu0 %v803
        %v805 = vpop.xlane.xlu0 %804
        %s806 = scalar_lea.vmem %s3, 3
        %v807 = vld [vmem:[%s806] sm:$0x1]
        %v809 = vlaneseq
        %v810 = vshrl.u32 %v809, 7
        %v811 = vsub.s32 0, %v810
        %v812 = vrot.slane %v807, %v811
        %813 = vset.pattern.permute.xlu0 0
        %814 = vperm.xlu0 %813, %v812
        %v815 = vpop.permute.xlu0 %814
        %v817 = vadd.f32 %v784, %v815
        %v818 = vadd.f32 %v787, %v815
        %v819 = vadd.f32 %v790, %v815
        %v820 = vadd.f32 %v793, %v815
        %v821 = vadd.f32 %v796, %v815
        %v822 = vadd.f32 %v799, %v815
        %v823 = vadd.f32 %v802, %v815
        %v824 = vadd.f32 %v805, %v815
        %v825 = vmax.f32 %v817, 0.0
        %v826 = vmax.f32 %v818, 0.0
        %v827 = vmax.f32 %v819, 0.0
        %v828 = vmax.f32 %v820, 0.0
        %v829 = vmax.f32 %v821, 0.0
        %v830 = vmax.f32 %v822, 0.0
        %v831 = vmax.f32 %v823, 0.0
        %v832 = vmax.f32 %v824, 0.0
        %v833 = vmax.f32 %v825, 1e-06
        %v834 = vmax.f32 %v826, 1e-06
        %v835 = vmax.f32 %v827, 1e-06
        %v836 = vmax.f32 %v828, 1e-06
        %v837 = vmax.f32 %v829, 1e-06
        %v838 = vmax.f32 %v830, 1e-06
        %v839 = vmax.f32 %v831, 1e-06
        %v840 = vmax.f32 %v832, 1e-06
        %v841 = vlog2.pop %v833
        %v842 = vmul.f32 %v841, 0.6931472
        %v843 = vlog2.pop %v834
        %v844 = vmul.f32 %v843, 0.6931472
        %v845 = vlog2.pop %v835
        %v846 = vmul.f32 %v845, 0.6931472
        %v847 = vlog2.pop %v836
        %v848 = vmul.f32 %v847, 0.6931472
        %v849 = vlog2.pop %v837
        %v850 = vmul.f32 %v849, 0.6931472
        %v851 = vlog2.pop %v838
        %v852 = vmul.f32 %v851, 0.6931472
        %v853 = vlog2.pop %v839
        %v854 = vmul.f32 %v853, 0.6931472
        %v855 = vlog2.pop %v840
        %v856 = vmul.f32 %v855, 0.6931472
        %v857 = vadd.f32 %v842, %v336
        %v858 = vadd.f32 %v844, %v336
        %v859 = vadd.f32 %v846, %v336
        %v860 = vadd.f32 %v848, %v336
        %v861 = vadd.f32 %v850, %v336
        %v862 = vadd.f32 %v852, %v336
        %v863 = vadd.f32 %v854, %v336
        %v864 = vadd.f32 %v856, %v336
        %873 = vset.pattern.permute.xlu0 0
        %874 = vperm.xlu0 %873, %v857
        %v875 = vpop.permute.xlu0 %874
        %876 = vset.pattern.permute.xlu0 0
        %877 = vperm.xlu0 %876, %v858
        %v878 = vpop.permute.xlu0 %877
        %879 = vset.pattern.permute.xlu0 0
        %880 = vperm.xlu0 %879, %v859
        %v881 = vpop.permute.xlu0 %880
        %882 = vset.pattern.permute.xlu0 0
        %883 = vperm.xlu0 %882, %v860
        %v884 = vpop.permute.xlu0 %883
        %885 = vset.pattern.permute.xlu0 0
        %886 = vperm.xlu0 %885, %v861
        %v887 = vpop.permute.xlu0 %886
        %888 = vset.pattern.permute.xlu0 0
        %889 = vperm.xlu0 %888, %v862
        %v890 = vpop.permute.xlu0 %889
        %891 = vset.pattern.permute.xlu0 0
        %892 = vperm.xlu0 %891, %v863
        %v893 = vpop.permute.xlu0 %892
        %894 = vset.pattern.permute.xlu0 0
        %895 = vperm.xlu0 %894, %v864
        %v896 = vpop.permute.xlu0 %895
        %v897 = vlaneseq
        %v898 = vshrl.u32 %v897, 7
        %v899 = vsub.s32 %v379, %v898
        %v900 = vrot.slane %v875, %v899
        %v901 = vlaneseq
        %v902 = vshrl.u32 %v901, 7
        %v903 = vsub.s32 %v379, %v902
        %v904 = vrot.slane %v878, %v903
        %v905 = vlaneseq
        %v906 = vshrl.u32 %v905, 7
        %v907 = vsub.s32 %v379, %v906
        %v908 = vrot.slane %v881, %v907
        %v909 = vlaneseq
        %v910 = vshrl.u32 %v909, 7
        %v911 = vsub.s32 %v379, %v910
        %v912 = vrot.slane %v884, %v911
        %v913 = vlaneseq
        %v914 = vshrl.u32 %v913, 7
        %v915 = vsub.s32 %v379, %v914
        %v916 = vrot.slane %v887, %v915
        %v917 = vlaneseq
        %v918 = vshrl.u32 %v917, 7
        %v919 = vsub.s32 %v379, %v918
        %v920 = vrot.slane %v890, %v919
        %v921 = vlaneseq
        %v922 = vshrl.u32 %v921, 7
        %v923 = vsub.s32 %v379, %v922
        %v924 = vrot.slane %v893, %v923
        %v925 = vlaneseq
        %v926 = vshrl.u32 %v925, 7
        %v927 = vsub.s32 %v379, %v926
        %v928 = vrot.slane %v896, %v927
        %v929 = vsel %vm412, %v904, %v900
        %v930 = vsel %vm414, %v908, %v929
        %v931 = vsel %vm416, %v912, %v930
        %v932 = vsel %vm418, %v916, %v931
        %v933 = vsel %vm420, %v920, %v932
        %v934 = vsel %vm422, %v924, %v933
        %v935 = vsel %vm424, %v928, %v934
        %s937 = scalar_lea.vmem %s226, 24 [#allocation5]
        %938 = vst.msk [vmem:[%s937] sm:$0xff] %vm427, %v935
        %s939 = sand.u32 %s123, 1
        %s940 = scalar_lea.sflag [#allocation4], %s939
        %s941 = sand.u32 %s123, 1
        %s942 = smul.addr %s941, 32
        %s943 = scalar_lea.vmem [#allocation5], %s942
        // Predicated region
        $region41: #{tpu_custom_call.1} parent=35 // pred_check
          %p944 = pneg %p133
        $region42: #{tpu_custom_call.1} parent=35 // pred_check_branch
          %946 = sbr.rel (%p944) target = $region44
        $region43: #{tpu_custom_call.1} parent=35 // pred_region
          %s948 = ssub.s32 512, 512
          %949 = vsyncadd %s940, %s948
          %s950 = smul.addr %s21, 4
          %s951 = smul.addr %s950, 128
          %s952 = scalar_lea.hbm %s4, %s951
          %s953 = sshll.u32 %s943, 4
          %s954 = int_to_ptr.vmem [resolvable:$true] %s953
          %959 = dma.vmem_to_hbm [thread:$0]  %s954, 512, %s952, %s940, 128, 128, 8
        $region44: #{tpu_custom_call.1} parent=35 // pred_fallthru
          _
      $region36: #{tpu_custom_call.1} parent=5 // pred_fallthru
        _
      %p960 = scmp.le.s32.totalorder 2, %s16
      // Predicated region
      $region45: #{tpu_custom_call.1} parent=5 // pred_check
        %p961 = pneg %p960
      $region46: #{tpu_custom_call.1} parent=5 // pred_check_branch
        %963 = sbr.rel (%p961) target = $region48
      $region47: #{tpu_custom_call.1} parent=5 // pred_region
        %s964 = ssub.s32 %s16, 2
        // Predicated region
        $region49: #{tpu_custom_call.1} parent=47 // pred_check
          %p965 = pneg %p139
        $region50: #{tpu_custom_call.1} parent=47 // pred_check_branch
          %967 = sbr.rel (%p965) target = $region52
        $region51: #{tpu_custom_call.1} parent=47 // pred_region
          %s968 = sand.u32 %s124, 1
          %s969 = scalar_lea.sflag [#allocation4], %s968
          %s970 = sand.u32 %s124, 1
          %s971 = smul.addr %s970, 32
          %s972 = scalar_lea.vmem [#allocation5], %s971
          %973 = dma.done %s969, 512
        $region52: #{tpu_custom_call.1} parent=47 // pred_fallthru
          _
      $region48: #{tpu_custom_call.1} parent=5 // pred_fallthru
        _
    $region6: #{tpu_custom_call.1} parent=1 // loop_footer
      %s20 = sadd.s32 1, %s16
    $region7: #{tpu_custom_call.1} parent=1 // loop_footer_branch
      %15 = sbr.rel target = $region3
    $region8: #{tpu_custom_call.1} parent=1 // loop_exit
      _
    %974 = vsyncpa [#allocation3], 1
    %s975 = scalar_lea.sflag [#allocation3], 1
    %976 = vsyncpa %s975, 1
    %977 = vsyncpa [#allocation4], 1
    %s978 = scalar_lea.sflag [#allocation4], 1
    %979 = vsyncpa %s978, 1

</llo_original>
